<compile_context>
chip_gen: v5e
topology: v5e:2x2
jax: 0.10.0
libtpu: 0.0.40
codegen_flags: <defaults>
</compile_context>

<pallas_src>
import functools

import jax
import jax.numpy as jnp
from jax.experimental import pallas as pl
from jax.experimental.pallas import tpu as pltpu


def _round_up(x, m):
    return ((x + m - 1) // m) * m


def _mlp_kernel(s_ref, a_ref, w1s_ref, w1a_ref, b1_ref, w2_ref, b2_ref,
                w3_ref, b3_ref, o_ref):
    # Layer 1: split-K matmul replaces the concat: [s|a] @ W1 == s@W1s + a@W1a.
    h = jnp.dot(s_ref[...].astype(jnp.bfloat16), w1s_ref[...],
                preferred_element_type=jnp.float32)
    h += jnp.dot(a_ref[...].astype(jnp.bfloat16), w1a_ref[...],
                 preferred_element_type=jnp.float32)
    h = jnp.maximum(h + b1_ref[...], 0.0)
    # Layer 2: Linear + ReLU (bf16 operands, f32 accumulate, f32 epilogue).
    h = jnp.dot(h.astype(jnp.bfloat16), w2_ref[...],
                preferred_element_type=jnp.float32)
    h = jnp.maximum(h + b2_ref[...], 0.0)
    # Layer 3: Linear (no activation); bias add fused into the store.
    out = jnp.dot(h.astype(jnp.bfloat16), w3_ref[...],
                  preferred_element_type=jnp.float32)
    o_ref[...] = (out + b3_ref[...]).astype(o_ref.dtype)


# VMEM budget used for tile sizing.  Kept <= ~44 MiB so the kernel is safe on
# every generation, including v7x's 64 MiB/TC (v5e/v6e have 128 MiB physical).
_VMEM_CAP = 44 * 1024 * 1024


def _vmem_bytes(tb, s_dim, a_dim, s_out, h_dim):
    """Conservative per-step VMEM footprint (lane padding + f32 input tiles)."""
    lane = lambda n: _round_up(n, 128)
    # Double-buffered batch tiles: state/action/out stream as f32 and any block
    # with a last dim < 128 is lane-padded to 128 lanes in VMEM.
    tiles = 2 * tb * (lane(s_dim) + lane(a_dim) + lane(s_out)) * 4
    # Weights/biases have constant block indices but the pipeline still
    # allocates two buffers for them -> count x2.
    wts = 2 * (
        (_round_up(s_dim, 16) + _round_up(a_dim, 16) + _round_up(h_dim, 16))
        * lane(h_dim) * 2                              # W1s, W1a, W2 (bf16)
        + _round_up(h_dim, 16) * lane(s_out) * 2       # W3 (bf16)
        + 2 * 8 * lane(h_dim) * 4                      # b1, b2 (f32)
        + 8 * lane(s_out) * 4)                         # b3 (f32)
    return tiles + wts


@functools.partial(jax.jit, static_argnames=("batch_tile",))
def dynamics_model_forward(state, action, params, *, batch_tile=4096):
    """Pallas implementation of DynamicsModel.forward(state, action)."""
    w1, b1, w2, b2, w3, b3 = params
    B, S_dim = state.shape
    A_dim = action.shape[1]
    H = w1.shape[1]
    S_out = w3.shape[1]

    # --- boundary prep: tiny, weight-sized ops, done once per call ----------
    w1_s = w1[:S_dim].astype(jnp.bfloat16)   # split W1 along its input dim
    w1_a = w1[S_dim:].astype(jnp.bfloat16)
    w2_b = w2.astype(jnp.bfloat16)
    w3_b = w3.astype(jnp.bfloat16)           # unpadded: output stays S_out wide
    b1_f = b1.astype(jnp.float32)
    b2_f = b2.astype(jnp.float32)
    b3_f = b3.astype(jnp.float32)

    # --- batch tiling --------------------------------------------------------
    # Tiles are multiples of 8 sublanes and as large as the VMEM budget allows
    # (amortizes per-grid-step overhead); at least 2 steps so both v7x cores
    # get work; the ragged last tile is masked by the pipeline (no jnp.pad).
    tb = max(8, min(_round_up(batch_tile, 8), _round_up(B, 8)))
    if B >= 16 and pl.cdiv(B, tb) < 2:
        tb = max(8, _round_up(pl.cdiv(B, 2), 8))
    while tb > 8 and _vmem_bytes(tb, S_dim, A_dim, S_out, H) > _VMEM_CAP:
        tb = max(8, _round_up(tb // 2, 8))
    n_tiles = pl.cdiv(B, tb)

    vmem_limit = int(min(
        56 * 1024 * 1024,
        max(_vmem_bytes(tb, S_dim, A_dim, S_out, H) + (4 << 20),
            16 * 1024 * 1024)))

    tiled = lambda i: (i, 0)      # batch-tiled operands
    resident = lambda i: (0, 0)   # constant block index -> stays in VMEM

    out = pl.pallas_call(
        _mlp_kernel,
        out_shape=jax.ShapeDtypeStruct((B, S_out), jnp.float32),
        grid=(n_tiles,),
        in_specs=[
            pl.BlockSpec((tb, S_dim), tiled),      # state tile
            pl.BlockSpec((tb, A_dim), tiled),      # action tile
            pl.BlockSpec((S_dim, H), resident),    # W1 (state rows)
            pl.BlockSpec((A_dim, H), resident),    # W1 (action rows)
            pl.BlockSpec((1, H), resident),        # b1
            pl.BlockSpec((H, H), resident),        # W2
            pl.BlockSpec((1, H), resident),        # b2
            pl.BlockSpec((H, S_out), resident),    # W3 (unpadded)
            pl.BlockSpec((1, S_out), resident),    # b3 (unpadded)
        ],
        out_specs=pl.BlockSpec((tb, S_out), tiled),
        compiler_params=pltpu.CompilerParams(
            dimension_semantics=("parallel",),
            vmem_limit_bytes=vmem_limit,
        ),
    )(state, action, w1_s, w1_a, b1_f, w2_b, b2_f, w3_b, b3_f)

    return out


def init_params(key, state_dim, action_dim, hidden_dim=128):
    """Deterministic synthetic parameters; weights stored as [in, out]."""
    d_in = state_dim + action_dim
    k = jax.random.split(key, 6)
    s1 = 1.0 / jnp.sqrt(d_in)
    s2 = 1.0 / jnp.sqrt(hidden_dim)
    w1 = jax.random.uniform(k[0], (d_in, hidden_dim), jnp.float32, -s1, s1)
    b1 = jax.random.uniform(k[1], (1, hidden_dim), jnp.float32, -s1, s1)
    w2 = jax.random.uniform(k[2], (hidden_dim, hidden_dim), jnp.float32, -s2, s2)
    b2 = jax.random.uniform(k[3], (1, hidden_dim), jnp.float32, -s2, s2)
    w3 = jax.random.uniform(k[4], (hidden_dim, state_dim), jnp.float32, -s2, s2)
    b3 = jax.random.uniform(k[5], (1, state_dim), jnp.float32, -s2, s2)
    return (w1, b1, w2, b2, w3, b3)


def _reference_forward_f32(state, action, params):
    w1, b1, w2, b2, w3, b3 = params
    x = jnp.concatenate([state, action], axis=1)
    h = jnp.maximum(x @ w1 + b1, 0.0)
    h = jnp.maximum(h @ w2 + b2, 0.0)
    return h @ w3 + b3


def _reference_forward_bf16(state, action, params):
    """Same bf16-operand / f32-accumulate data path as the kernel."""
    w1, b1, w2, b2, w3, b3 = params
    x = jnp.concatenate([state, action], axis=1).astype(jnp.bfloat16)
    h = jnp.dot(x, w1.astype(jnp.bfloat16),
                preferred_element_type=jnp.float32) + b1
    h = jnp.maximum(h, 0.0)
    h = jnp.dot(h.astype(jnp.bfloat16), w2.astype(jnp.bfloat16),
                preferred_element_type=jnp.float32) + b2
    h = jnp.maximum(h, 0.0)
    return jnp.dot(h.astype(jnp.bfloat16), w3.astype(jnp.bfloat16),
                   preferred_element_type=jnp.float32) + b3


if __name__ == "__main__":
    key = jax.random.PRNGKey(0)
    k_state, k_action, k_params = jax.random.split(key, 3)

    batch = 128          # auto-tiling picks tb=64 -> 2 grid steps
    state_dim = 16
    action_dim = 8
    hidden_dim = 32

    state = jax.random.normal(k_state, (batch, state_dim), jnp.float32)
    action = jax.random.normal(k_action, (batch, action_dim), jnp.float32)
    params = init_params(k_params, state_dim, action_dim, hidden_dim)

    out = dynamics_model_forward(state, action, params)
    out = jax.block_until_ready(out)
    assert out.shape == (batch, state_dim)

    # Tight check vs a reference using the same bf16/f32-acc data path.
    ref_bf16 = _reference_forward_bf16(state, action, params)
    assert jnp.allclose(out, ref_bf16, atol=1e-2, rtol=1e-2), float(
        jnp.max(jnp.abs(out - ref_bf16)))
    # Loose sanity check vs the pure-f32 PyTorch-equivalent reference.
    ref_f32 = _reference_forward_f32(state, action, params)
    assert jnp.allclose(out, ref_f32, atol=1e-1, rtol=1e-1), float(
        jnp.max(jnp.abs(out - ref_f32)))

    print("KERNEL_OK")
</pallas_src>

<mosaic_0001>
module attributes {stable_mosaic.version = 11 : i64} {
  func.func @_mlp_kernel(%arg0: i32, %arg1: memref<64x16xf32, #tpu.memory_space<vmem>>, %arg2: memref<64x8xf32, #tpu.memory_space<vmem>>, %arg3: memref<16x32xbf16, #tpu.memory_space<vmem>>, %arg4: memref<8x32xbf16, #tpu.memory_space<vmem>>, %arg5: memref<1x32xf32, #tpu.memory_space<vmem>>, %arg6: memref<32x32xbf16, #tpu.memory_space<vmem>>, %arg7: memref<1x32xf32, #tpu.memory_space<vmem>>, %arg8: memref<32x16xbf16, #tpu.memory_space<vmem>>, %arg9: memref<1x16xf32, #tpu.memory_space<vmem>>, %arg10: memref<64x16xf32, #tpu.memory_space<vmem>>) attributes {dimension_semantics = [#tpu.dimension_semantics<parallel>], iteration_bounds = array<i64: 2>, scalar_prefetch = 0 : i64, scratch_operands = 0 : i64, tpu.core_type = #tpu.core_type<tc>, window_params = [{transform_indices = @transform_0, window_bounds = array<i64: 64, 16>}, {transform_indices = @transform_1, window_bounds = array<i64: 64, 8>}, {pipeline_mode = #tpu.pipeline_mode<synchronous>, transform_indices = @transform_2, window_bounds = array<i64: 16, 32>}, {pipeline_mode = #tpu.pipeline_mode<synchronous>, transform_indices = @transform_3, window_bounds = array<i64: 8, 32>}, {pipeline_mode = #tpu.pipeline_mode<synchronous>, transform_indices = @transform_4, window_bounds = array<i64: 1, 32>}, {pipeline_mode = #tpu.pipeline_mode<synchronous>, transform_indices = @transform_5, window_bounds = array<i64: 32, 32>}, {pipeline_mode = #tpu.pipeline_mode<synchronous>, transform_indices = @transform_6, window_bounds = array<i64: 1, 32>}, {pipeline_mode = #tpu.pipeline_mode<synchronous>, transform_indices = @transform_7, window_bounds = array<i64: 32, 16>}, {pipeline_mode = #tpu.pipeline_mode<synchronous>, transform_indices = @transform_8, window_bounds = array<i64: 1, 16>}, {transform_indices = @transform_9, window_bounds = array<i64: 64, 16>}]} {
    %c0 = arith.constant 0 : index
    %c0_0 = arith.constant 0 : index
    %0 = vector.load %arg1[%c0, %c0_0] : memref<64x16xf32, #tpu.memory_space<vmem>>, vector<64x16xf32>
    %1 = arith.truncf %0 : vector<64x16xf32> to vector<64x16xbf16>
    %c0_1 = arith.constant 0 : index
    %c0_2 = arith.constant 0 : index
    %2 = vector.load %arg3[%c0_1, %c0_2] : memref<16x32xbf16, #tpu.memory_space<vmem>>, vector<16x32xbf16>
    %cst = arith.constant dense<0.000000e+00> : vector<64x32xf32>
    %3 = tpu.matmul %1, %2, %cst {dimension_numbers = #tpu.dot_dimension_numbers<[1], [0], [0], [1], [0, 0, 1, 1], [], []>} : vector<64x16xbf16>, vector<16x32xbf16>, vector<64x32xf32> -> vector<64x32xf32>
    %c0_3 = arith.constant 0 : index
    %c0_4 = arith.constant 0 : index
    %4 = vector.load %arg2[%c0_3, %c0_4] : memref<64x8xf32, #tpu.memory_space<vmem>>, vector<64x8xf32>
    %5 = arith.truncf %4 : vector<64x8xf32> to vector<64x8xbf16>
    %c0_5 = arith.constant 0 : index
    %c0_6 = arith.constant 0 : index
    %6 = vector.load %arg4[%c0_5, %c0_6] : memref<8x32xbf16, #tpu.memory_space<vmem>>, vector<8x32xbf16>
    %cst_7 = arith.constant dense<0.000000e+00> : vector<64x32xf32>
    %7 = tpu.matmul %5, %6, %cst_7 {dimension_numbers = #tpu.dot_dimension_numbers<[1], [0], [0], [1], [0, 0, 1, 1], [], []>} : vector<64x8xbf16>, vector<8x32xbf16>, vector<64x32xf32> -> vector<64x32xf32>
    %8 = arith.addf %3, %7 : vector<64x32xf32>
    %c0_8 = arith.constant 0 : index
    %c0_9 = arith.constant 0 : index
    %9 = vector.load %arg5[%c0_8, %c0_9] : memref<1x32xf32, #tpu.memory_space<vmem>>, vector<1x32xf32>
    %10 = vector.broadcast %9 : vector<1x32xf32> to vector<64x32xf32>
    %11 = arith.addf %8, %10 : vector<64x32xf32>
    %cst_10 = arith.constant 0.000000e+00 : f32
    %12 = vector.broadcast %cst_10 : f32 to vector<64x32xf32>
    %13 = arith.maximumf %11, %12 : vector<64x32xf32>
    %14 = arith.truncf %13 : vector<64x32xf32> to vector<64x32xbf16>
    %c0_11 = arith.constant 0 : index
    %c0_12 = arith.constant 0 : index
    %15 = vector.load %arg6[%c0_11, %c0_12] : memref<32x32xbf16, #tpu.memory_space<vmem>>, vector<32x32xbf16>
    %cst_13 = arith.constant dense<0.000000e+00> : vector<64x32xf32>
    %16 = tpu.matmul %14, %15, %cst_13 {dimension_numbers = #tpu.dot_dimension_numbers<[1], [0], [0], [1], [0, 0, 1, 1], [], []>} : vector<64x32xbf16>, vector<32x32xbf16>, vector<64x32xf32> -> vector<64x32xf32>
    %c0_14 = arith.constant 0 : index
    %c0_15 = arith.constant 0 : index
    %17 = vector.load %arg7[%c0_14, %c0_15] : memref<1x32xf32, #tpu.memory_space<vmem>>, vector<1x32xf32>
    %18 = vector.broadcast %17 : vector<1x32xf32> to vector<64x32xf32>
    %19 = arith.addf %16, %18 : vector<64x32xf32>
    %cst_16 = arith.constant 0.000000e+00 : f32
    %20 = vector.broadcast %cst_16 : f32 to vector<64x32xf32>
    %21 = arith.maximumf %19, %20 : vector<64x32xf32>
    %22 = arith.truncf %21 : vector<64x32xf32> to vector<64x32xbf16>
    %c0_17 = arith.constant 0 : index
    %c0_18 = arith.constant 0 : index
    %23 = vector.load %arg8[%c0_17, %c0_18] : memref<32x16xbf16, #tpu.memory_space<vmem>>, vector<32x16xbf16>
    %cst_19 = arith.constant dense<0.000000e+00> : vector<64x16xf32>
    %24 = tpu.matmul %22, %23, %cst_19 {dimension_numbers = #tpu.dot_dimension_numbers<[1], [0], [0], [1], [0, 0, 1, 1], [], []>} : vector<64x32xbf16>, vector<32x16xbf16>, vector<64x16xf32> -> vector<64x16xf32>
    %c0_20 = arith.constant 0 : index
    %c0_21 = arith.constant 0 : index
    %25 = vector.load %arg9[%c0_20, %c0_21] : memref<1x16xf32, #tpu.memory_space<vmem>>, vector<1x16xf32>
    %26 = vector.broadcast %25 : vector<1x16xf32> to vector<64x16xf32>
    %27 = arith.addf %24, %26 : vector<64x16xf32>
    %c0_22 = arith.constant 0 : index
    %c0_23 = arith.constant 0 : index
    %28 = vector.load %arg10[%c0_22, %c0_23] : memref<64x16xf32, #tpu.memory_space<vmem>>, vector<64x16xf32>
    tpu.vector_store %arg10[%c0_22, %c0_23], %27 {strides = array<i32>} : memref<64x16xf32, #tpu.memory_space<vmem>>, vector<64x16xf32>,
    return
  }
  func.func @transform_0(%arg0: i32) -> (i32, i32) {
    %c0_i32 = arith.constant 0 : i32
    %c0_i32_0 = arith.constant 0 : i32
    return %arg0, %c0_i32 : i32, i32
  }
  func.func @transform_1(%arg0: i32) -> (i32, i32) {
    %c0_i32 = arith.constant 0 : i32
    %c0_i32_0 = arith.constant 0 : i32
    return %arg0, %c0_i32 : i32, i32
  }
  func.func @transform_2(%arg0: i32) -> (i32, i32) {
    %c0_i32 = arith.constant 0 : i32
    %c0_i32_0 = arith.constant 0 : i32
    %c0_i32_1 = arith.constant 0 : i32
    return %c0_i32, %c0_i32_0 : i32, i32
  }
  func.func @transform_3(%arg0: i32) -> (i32, i32) {
    %c0_i32 = arith.constant 0 : i32
    %c0_i32_0 = arith.constant 0 : i32
    %c0_i32_1 = arith.constant 0 : i32
    return %c0_i32, %c0_i32_0 : i32, i32
  }
  func.func @transform_4(%arg0: i32) -> (i32, i32) {
    %c0_i32 = arith.constant 0 : i32
    %c0_i32_0 = arith.constant 0 : i32
    %c0_i32_1 = arith.constant 0 : i32
    return %c0_i32, %c0_i32_0 : i32, i32
  }
  func.func @transform_5(%arg0: i32) -> (i32, i32) {
    %c0_i32 = arith.constant 0 : i32
    %c0_i32_0 = arith.constant 0 : i32
    %c0_i32_1 = arith.constant 0 : i32
    return %c0_i32, %c0_i32_0 : i32, i32
  }
  func.func @transform_6(%arg0: i32) -> (i32, i32) {
    %c0_i32 = arith.constant 0 : i32
    %c0_i32_0 = arith.constant 0 : i32
    %c0_i32_1 = arith.constant 0 : i32
    return %c0_i32, %c0_i32_0 : i32, i32
  }
  func.func @transform_7(%arg0: i32) -> (i32, i32) {
    %c0_i32 = arith.constant 0 : i32
    %c0_i32_0 = arith.constant 0 : i32
    %c0_i32_1 = arith.constant 0 : i32
    return %c0_i32, %c0_i32_0 : i32, i32
  }
  func.func @transform_8(%arg0: i32) -> (i32, i32) {
    %c0_i32 = arith.constant 0 : i32
    %c0_i32_0 = arith.constant 0 : i32
    %c0_i32_1 = arith.constant 0 : i32
    return %c0_i32, %c0_i32_0 : i32, i32
  }
  func.func @transform_9(%arg0: i32) -> (i32, i32) {
    %c0_i32 = arith.constant 0 : i32
    %c0_i32_0 = arith.constant 0 : i32
    return %arg0, %c0_i32 : i32, i32
  }
}

</mosaic_0001>

<llo_original>
// kernel: dynamics_model_forward.1
$region0: #{dynamics_model_forward.1}
  #allocation0 [shape = 'u32[]', space=smem, size = 0x4, offset = 0x4, fixed_abs, tag = 'smem constant byte address 0x4 - core index']
  #allocation1 [shape = 'u32[72,128]{1,0:T(1,128)}', space=vmem, size = 0x9000, scoped, tag = 'internal scratch']
  %s0 = inlined_call_operand.vmem [shape: f32[128,16], index: 0, kind: input, shape index: {}]
  %s1 = inlined_call_operand.vmem [shape: f32[128,8], index: 1, kind: input, shape index: {}]
  %s2 = inlined_call_operand.vmem [shape: bf16[16,32], index: 2, kind: input, shape index: {}]
  %s3 = inlined_call_operand.vmem [shape: bf16[8,32], index: 3, kind: input, shape index: {}]
  %s4 = inlined_call_operand.vmem [shape: f32[1,32], index: 4, kind: input, shape index: {}]
  %s5 = inlined_call_operand.vmem [shape: bf16[32,32], index: 5, kind: input, shape index: {}]
  %s6 = inlined_call_operand.vmem [shape: f32[1,32], index: 6, kind: input, shape index: {}]
  %s7 = inlined_call_operand.vmem [shape: bf16[32,16], index: 7, kind: input, shape index: {}]
  %s8 = inlined_call_operand.vmem [shape: f32[1,16], index: 8, kind: input, shape index: {}]
  %s9 = inlined_call_operand.vmem [shape: f32[128,16], index: 9, kind: output, shape index: {}]
  %s10 = sld [smem:[#allocation0]]
  $region69: #{dynamics_model_forward.1} parent=0
    _
  %s12 = ssub.s32 1, %s10
  %s13 = scalar_select 0, %s12, %s10
  loop: start=0, step=1, limit=4
  $region2: #{dynamics_model_forward.1} parent=0 // loop_pre_header
    _
  $region3: #{dynamics_model_forward.1} parent=0 // loop_header
    %s15 = sphi 0, %s19
    %p16 = scmp.ge.s32.totalorder %s15, 4
    %s25 = sphi 0, %s27
    %s28 = sphi 0, %s25
    %s29 = sphi 0, %s28
    %s45 = sphi 0, %s29
    %s51 = sphi 0, %s53
    %s54 = sphi 0, %s51
    %s55 = sphi 0, %s54
    %s71 = sphi 0, %s55
    %s75 = sphi 0, %s75
    %s77 = sphi 0, %s75
    %s78 = sphi 0, %s77
    %s92 = sphi 0, %s78
    %s96 = sphi 0, %s96
    %s98 = sphi 0, %s96
    %s99 = sphi 0, %s98
    %s113 = sphi 0, %s99
    %s117 = sphi 0, %s117
    %s119 = sphi 0, %s117
    %s120 = sphi 0, %s119
    %s134 = sphi 0, %s120
    %s138 = sphi 0, %s138
    %s140 = sphi 0, %s138
    %s141 = sphi 0, %s140
    %s155 = sphi 0, %s141
    %s159 = sphi 0, %s159
    %s161 = sphi 0, %s159
    %s162 = sphi 0, %s161
    %s176 = sphi 0, %s162
    %s180 = sphi 0, %s180
    %s182 = sphi 0, %s180
    %s183 = sphi 0, %s182
    %s197 = sphi 0, %s183
    %s201 = sphi 0, %s201
    %s203 = sphi 0, %s201
    %s204 = sphi 0, %s203
    %s218 = sphi 0, %s204
    %s224 = sphi 0, %s226
    %s227 = sphi 0, %s224
    %s228 = sphi 0, %s227
    %s244 = sphi 0, %s228
  $region4: #{dynamics_model_forward.1} parent=0 // loop_header_branch
    %18 = sbr.rel (%p16) target = $region8
  $region5: #{dynamics_model_forward.1} parent=0 // loop_body
    %s20 = ssub.s32 %s15, 1
    %s21 = ssub.s32 %s15, 2
    %s22 = sadd.s32 %s15, 1
    %s23 = ssub.s32 %s15, %s22
    %p24 = scmp.eq.s32.totalorder %s23, 0
    %s26 = sadd.s32 %s25, 1
    %s27 = scalar_select %p24, %s25, %s26
    %p30 = pneg %p24
    %p31 = scmp.eq.s32.totalorder %s15, 1
    %p32 = por %p30, %p31
    %p33 = scmp.ne.s32.totalorder %s25, %s28
    %p34 = scmp.eq.s32.totalorder %s15, 0
    %p35 = por %p33, %p34
    %p36 = scmp.ne.s32.totalorder %s25, %s28
    %p37 = scmp.eq.s32.totalorder %s20, 1
    %p38 = por %p36, %p37
    %p39 = scmp.ne.s32.totalorder %s28, %s29
    %p40 = scmp.eq.s32.totalorder %s20, 0
    %p41 = por %p39, %p40
    %p42 = scmp.ne.s32.totalorder %s28, %s29
    %p43 = scmp.eq.s32.totalorder %s21, 1
    %p44 = por %p42, %p43
    %p46 = scmp.ne.s32.totalorder %s29, %s45
    %p47 = scmp.eq.s32.totalorder %s21, 0
    %p48 = por %p46, %p47
    %s49 = ssub.s32 %s15, %s22
    %p50 = scmp.eq.s32.totalorder %s49, 0
    %s52 = sadd.s32 %s51, 1
    %s53 = scalar_select %p50, %s51, %s52
    %p56 = pneg %p50
    %p57 = scmp.eq.s32.totalorder %s15, 1
    %p58 = por %p56, %p57
    %p59 = scmp.ne.s32.totalorder %s51, %s54
    %p60 = scmp.eq.s32.totalorder %s15, 0
    %p61 = por %p59, %p60
    %p62 = scmp.ne.s32.totalorder %s51, %s54
    %p63 = scmp.eq.s32.totalorder %s20, 1
    %p64 = por %p62, %p63
    %p65 = scmp.ne.s32.totalorder %s54, %s55
    %p66 = scmp.eq.s32.totalorder %s20, 0
    %p67 = por %p65, %p66
    %p68 = scmp.ne.s32.totalorder %s54, %s55
    %p69 = scmp.eq.s32.totalorder %s21, 1
    %p70 = por %p68, %p69
    %p72 = scmp.ne.s32.totalorder %s55, %s71
    %p73 = scmp.eq.s32.totalorder %s21, 0
    %p74 = por %p72, %p73
    %s76 = sadd.s32 %s75, 1
    %p79 = scmp.eq.s32.totalorder %s15, 1
    %p80 = scmp.ne.s32.totalorder %s75, %s77
    %p81 = scmp.eq.s32.totalorder %s15, 0
    %p82 = por %p80, %p81
    %p83 = scmp.ne.s32.totalorder %s75, %s77
    %p84 = scmp.eq.s32.totalorder %s20, 1
    %p85 = por %p83, %p84
    %p86 = scmp.ne.s32.totalorder %s77, %s78
    %p87 = scmp.eq.s32.totalorder %s20, 0
    %p88 = por %p86, %p87
    %p89 = scmp.ne.s32.totalorder %s77, %s78
    %p90 = scmp.eq.s32.totalorder %s21, 1
    %p91 = por %p89, %p90
    %p93 = scmp.ne.s32.totalorder %s78, %s92
    %p94 = scmp.eq.s32.totalorder %s21, 0
    %p95 = por %p93, %p94
    %s97 = sadd.s32 %s96, 1
    %p100 = scmp.eq.s32.totalorder %s15, 1
    %p101 = scmp.ne.s32.totalorder %s96, %s98
    %p102 = scmp.eq.s32.totalorder %s15, 0
    %p103 = por %p101, %p102
    %p104 = scmp.ne.s32.totalorder %s96, %s98
    %p105 = scmp.eq.s32.totalorder %s20, 1
    %p106 = por %p104, %p105
    %p107 = scmp.ne.s32.totalorder %s98, %s99
    %p108 = scmp.eq.s32.totalorder %s20, 0
    %p109 = por %p107, %p108
    %p110 = scmp.ne.s32.totalorder %s98, %s99
    %p111 = scmp.eq.s32.totalorder %s21, 1
    %p112 = por %p110, %p111
    %p114 = scmp.ne.s32.totalorder %s99, %s113
    %p115 = scmp.eq.s32.totalorder %s21, 0
    %p116 = por %p114, %p115
    %s118 = sadd.s32 %s117, 1
    %p121 = scmp.eq.s32.totalorder %s15, 1
    %p122 = scmp.ne.s32.totalorder %s117, %s119
    %p123 = scmp.eq.s32.totalorder %s15, 0
    %p124 = por %p122, %p123
    %p125 = scmp.ne.s32.totalorder %s117, %s119
    %p126 = scmp.eq.s32.totalorder %s20, 1
    %p127 = por %p125, %p126
    %p128 = scmp.ne.s32.totalorder %s119, %s120
    %p129 = scmp.eq.s32.totalorder %s20, 0
    %p130 = por %p128, %p129
    %p131 = scmp.ne.s32.totalorder %s119, %s120
    %p132 = scmp.eq.s32.totalorder %s21, 1
    %p133 = por %p131, %p132
    %p135 = scmp.ne.s32.totalorder %s120, %s134
    %p136 = scmp.eq.s32.totalorder %s21, 0
    %p137 = por %p135, %p136
    %s139 = sadd.s32 %s138, 1
    %p142 = scmp.eq.s32.totalorder %s15, 1
    %p143 = scmp.ne.s32.totalorder %s138, %s140
    %p144 = scmp.eq.s32.totalorder %s15, 0
    %p145 = por %p143, %p144
    %p146 = scmp.ne.s32.totalorder %s138, %s140
    %p147 = scmp.eq.s32.totalorder %s20, 1
    %p148 = por %p146, %p147
    %p149 = scmp.ne.s32.totalorder %s140, %s141
    %p150 = scmp.eq.s32.totalorder %s20, 0
    %p151 = por %p149, %p150
    %p152 = scmp.ne.s32.totalorder %s140, %s141
    %p153 = scmp.eq.s32.totalorder %s21, 1
    %p154 = por %p152, %p153
    %p156 = scmp.ne.s32.totalorder %s141, %s155
    %p157 = scmp.eq.s32.totalorder %s21, 0
    %p158 = por %p156, %p157
    %s160 = sadd.s32 %s159, 1
    %p163 = scmp.eq.s32.totalorder %s15, 1
    %p164 = scmp.ne.s32.totalorder %s159, %s161
    %p165 = scmp.eq.s32.totalorder %s15, 0
    %p166 = por %p164, %p165
    %p167 = scmp.ne.s32.totalorder %s159, %s161
    %p168 = scmp.eq.s32.totalorder %s20, 1
    %p169 = por %p167, %p168
    %p170 = scmp.ne.s32.totalorder %s161, %s162
    %p171 = scmp.eq.s32.totalorder %s20, 0
    %p172 = por %p170, %p171
    %p173 = scmp.ne.s32.totalorder %s161, %s162
    %p174 = scmp.eq.s32.totalorder %s21, 1
    %p175 = por %p173, %p174
    %p177 = scmp.ne.s32.totalorder %s162, %s176
    %p178 = scmp.eq.s32.totalorder %s21, 0
    %p179 = por %p177, %p178
    %s181 = sadd.s32 %s180, 1
    %p184 = scmp.eq.s32.totalorder %s15, 1
    %p185 = scmp.ne.s32.totalorder %s180, %s182
    %p186 = scmp.eq.s32.totalorder %s15, 0
    %p187 = por %p185, %p186
    %p188 = scmp.ne.s32.totalorder %s180, %s182
    %p189 = scmp.eq.s32.totalorder %s20, 1
    %p190 = por %p188, %p189
    %p191 = scmp.ne.s32.totalorder %s182, %s183
    %p192 = scmp.eq.s32.totalorder %s20, 0
    %p193 = por %p191, %p192
    %p194 = scmp.ne.s32.totalorder %s182, %s183
    %p195 = scmp.eq.s32.totalorder %s21, 1
    %p196 = por %p194, %p195
    %p198 = scmp.ne.s32.totalorder %s183, %s197
    %p199 = scmp.eq.s32.totalorder %s21, 0
    %p200 = por %p198, %p199
    %s202 = sadd.s32 %s201, 1
    %p205 = scmp.eq.s32.totalorder %s15, 1
    %p206 = scmp.ne.s32.totalorder %s201, %s203
    %p207 = scmp.eq.s32.totalorder %s15, 0
    %p208 = por %p206, %p207
    %p209 = scmp.ne.s32.totalorder %s201, %s203
    %p210 = scmp.eq.s32.totalorder %s20, 1
    %p211 = por %p209, %p210
    %p212 = scmp.ne.s32.totalorder %s203, %s204
    %p213 = scmp.eq.s32.totalorder %s20, 0
    %p214 = por %p212, %p213
    %p215 = scmp.ne.s32.totalorder %s203, %s204
    %p216 = scmp.eq.s32.totalorder %s21, 1
    %p217 = por %p215, %p216
    %p219 = scmp.ne.s32.totalorder %s204, %s218
    %p220 = scmp.eq.s32.totalorder %s21, 0
    %p221 = por %p219, %p220
    %s222 = ssub.s32 %s15, %s22
    %p223 = scmp.eq.s32.totalorder %s222, 0
    %s225 = sadd.s32 %s224, 1
    %s226 = scalar_select %p223, %s224, %s225
    %p229 = pneg %p223
    %p230 = scmp.eq.s32.totalorder %s15, 1
    %p231 = por %p229, %p230
    %p232 = scmp.ne.s32.totalorder %s224, %s227
    %p233 = scmp.eq.s32.totalorder %s15, 0
    %p234 = por %p232, %p233
    %p235 = scmp.ne.s32.totalorder %s224, %s227
    %p236 = scmp.eq.s32.totalorder %s20, 1
    %p237 = por %p235, %p236
    %p238 = scmp.ne.s32.totalorder %s227, %s228
    %p239 = scmp.eq.s32.totalorder %s20, 0
    %p240 = por %p238, %p239
    %p241 = scmp.ne.s32.totalorder %s227, %s228
    %p242 = scmp.eq.s32.totalorder %s21, 1
    %p243 = por %p241, %p242
    %p245 = scmp.ne.s32.totalorder %s228, %s244
    %p246 = scmp.eq.s32.totalorder %s21, 0
    %p247 = por %p245, %p246
    %p248 = scmp.le.s32.totalorder 1, %s15
    %p249 = scmp.lt.s32.totalorder %s15, 3
    %p250 = pnand %p248, %p249
    %p251 = pneg %p250
    // Predicated region
    $region9: #{dynamics_model_forward.1} parent=5 // pred_check
      _
    $region10: #{dynamics_model_forward.1} parent=5 // pred_check_branch
      %253 = sbr.rel (%p250) target = $region12
    $region11: #{dynamics_model_forward.1} parent=5 // pred_region
      %s254 = ssub.s32 %s15, 1
      // Predicated region
      $region13: #{dynamics_model_forward.1} parent=11 // pred_check
        %p255 = pneg %p88
      $region14: #{dynamics_model_forward.1} parent=11 // pred_check_branch
        %257 = sbr.rel (%p255) target = $region16
      $region15: #{dynamics_model_forward.1} parent=11 // pred_region
        _
      $region16: #{dynamics_model_forward.1} parent=11 // pred_fallthru
        _
      // Predicated region
      $region17: #{dynamics_model_forward.1} parent=11 // pred_check
        %p258 = pneg %p109
      $region18: #{dynamics_model_forward.1} parent=11 // pred_check_branch
        %260 = sbr.rel (%p258) target = $region20
      $region19: #{dynamics_model_forward.1} parent=11 // pred_region
        _
      $region20: #{dynamics_model_forward.1} parent=11 // pred_fallthru
        _
      // Predicated region
      $region21: #{dynamics_model_forward.1} parent=11 // pred_check
        %p261 = pneg %p130
      $region22: #{dynamics_model_forward.1} parent=11 // pred_check_branch
        %263 = sbr.rel (%p261) target = $region24
      $region23: #{dynamics_model_forward.1} parent=11 // pred_region
        _
      $region24: #{dynamics_model_forward.1} parent=11 // pred_fallthru
        _
      // Predicated region
      $region25: #{dynamics_model_forward.1} parent=11 // pred_check
        %p264 = pneg %p151
      $region26: #{dynamics_model_forward.1} parent=11 // pred_check_branch
        %266 = sbr.rel (%p264) target = $region28
      $region27: #{dynamics_model_forward.1} parent=11 // pred_region
        _
      $region28: #{dynamics_model_forward.1} parent=11 // pred_fallthru
        _
      // Predicated region
      $region29: #{dynamics_model_forward.1} parent=11 // pred_check
        %p267 = pneg %p172
      $region30: #{dynamics_model_forward.1} parent=11 // pred_check_branch
        %269 = sbr.rel (%p267) target = $region32
      $region31: #{dynamics_model_forward.1} parent=11 // pred_region
        _
      $region32: #{dynamics_model_forward.1} parent=11 // pred_fallthru
        _
      // Predicated region
      $region33: #{dynamics_model_forward.1} parent=11 // pred_check
        %p270 = pneg %p193
      $region34: #{dynamics_model_forward.1} parent=11 // pred_check_branch
        %272 = sbr.rel (%p270) target = $region36
      $region35: #{dynamics_model_forward.1} parent=11 // pred_region
        _
      $region36: #{dynamics_model_forward.1} parent=11 // pred_fallthru
        _
      // Predicated region
      $region37: #{dynamics_model_forward.1} parent=11 // pred_check
        %p273 = pneg %p214
      $region38: #{dynamics_model_forward.1} parent=11 // pred_check_branch
        %275 = sbr.rel (%p273) target = $region40
      $region39: #{dynamics_model_forward.1} parent=11 // pred_region
        _
      $region40: #{dynamics_model_forward.1} parent=11 // pred_fallthru
        _
    $region12: #{dynamics_model_forward.1} parent=5 // pred_fallthru
      _
    %p276 = scmp.lt.s32.totalorder %s15, 2
    // Predicated region
    $region41: #{dynamics_model_forward.1} parent=5 // pred_check
      %p277 = pneg %p276
    $region42: #{dynamics_model_forward.1} parent=5 // pred_check_branch
      %279 = sbr.rel (%p277) target = $region44
    $region43: #{dynamics_model_forward.1} parent=5 // pred_region
      // Predicated region
      $region45: #{dynamics_model_forward.1} parent=43 // pred_check
        %p280 = pneg %p35
      $region46: #{dynamics_model_forward.1} parent=43 // pred_check_branch
        %282 = sbr.rel (%p280) target = $region48
      $region47: #{dynamics_model_forward.1} parent=43 // pred_region
        %s283 = smul.u32 8, %s15
        %p284 = scmp.lt.s32.totalorder %s283, 15
        %s285 = scalar_select %p284, %s283, 15
        %s286 = smul.addr %s285, 8
        %s287 = scalar_lea.vmem %s0, %s286
        %s288 = smul.u32 8, %s15
      $region48: #{dynamics_model_forward.1} parent=43 // pred_fallthru
        _
      // Predicated region
      $region49: #{dynamics_model_forward.1} parent=43 // pred_check
        %p289 = pneg %p61
      $region50: #{dynamics_model_forward.1} parent=43 // pred_check_branch
        %291 = sbr.rel (%p289) target = $region52
      $region51: #{dynamics_model_forward.1} parent=43 // pred_region
        %s292 = smul.u32 8, %s15
        %p293 = scmp.lt.s32.totalorder %s292, 15
        %s294 = scalar_select %p293, %s292, 15
        %s295 = smul.addr %s294, 8
        %s296 = scalar_lea.vmem %s1, %s295
        %s297 = smul.u32 8, %s15
      $region52: #{dynamics_model_forward.1} parent=43 // pred_fallthru
        _
    $region44: #{dynamics_model_forward.1} parent=5 // pred_fallthru
      _
    %p298 = scmp.le.s32.totalorder 1, %s15
    %p299 = scmp.lt.s32.totalorder %s15, 3
    %p300 = pnand %p298, %p299
    %p301 = pneg %p300
    // Predicated region
    $region53: #{dynamics_model_forward.1} parent=5 // pred_check
      _
    $region54: #{dynamics_model_forward.1} parent=5 // pred_check_branch
      %303 = sbr.rel (%p300) target = $region56
    $region55: #{dynamics_model_forward.1} parent=5 // pred_region
      %s304 = ssub.s32 %s15, 1
      %s305 = smul.u32 8, %s20
      %p306 = scmp.lt.s32.totalorder %s305, 15
      %s307 = scalar_select %p306, %s305, 15
      %s308 = smul.addr %s307, 8
      %s309 = scalar_lea.vmem %s0, %s308
      %p310 = pneg %p41
      %p311 = pneg %p38
      %s312 = smul.u32 8, %s20
      %p313 = scmp.lt.s32.totalorder %s312, 15
      %s314 = scalar_select %p313, %s312, 15
      %s315 = smul.addr %s314, 8
      %s316 = scalar_lea.vmem %s1, %s315
      %p317 = pneg %p67
      %p318 = pneg %p64
      %p319 = pneg %p88
      %p320 = pneg %p85
      %p321 = pneg %p109
      %p322 = pneg %p106
      %p323 = pneg %p130
      %p324 = pneg %p127
      %p325 = pneg %p151
      %p326 = pneg %p148
      %p327 = pneg %p172
      %p328 = pneg %p169
      %p329 = pneg %p193
      %p330 = pneg %p190
      %p331 = pneg %p214
      %p332 = pneg %p211
      %p333 = pneg %p240
      %p334 = pneg %p237
      %s335 = smul.u32 8, %s20
      %p336 = scmp.lt.s32.totalorder %s335, 15
      %s337 = scalar_select %p336, %s335, 15
      %s338 = smul.addr %s337, 8
      %s339 = scalar_lea.vmem %s9, %s338
      %s340 = smul.u32 8, %s20
      %p341 = scmp.lt.s32.totalorder %s340, 15
      %s342 = scalar_select %p341, %s340, 15
      %s343 = smul.addr %s342, 8
      %s344 = scalar_lea.vmem %s0, %s343
      %s345 = smul.u32 8, %s20
      %s346 = smul.u32 8, %s20
      %p347 = scmp.lt.s32.totalorder %s346, 15
      %s348 = scalar_select %p347, %s346, 15
      %s349 = smul.addr %s348, 8
      %s350 = scalar_lea.vmem %s1, %s349
      %s351 = smul.u32 8, %s20
      %s352 = smul.u32 8, %s20
      %p353 = scmp.lt.s32.totalorder %s352, 15
      %s354 = scalar_select %p353, %s352, 15
      %s355 = smul.addr %s354, 8
      %s356 = scalar_lea.vmem %s9, %s355
      %s357 = smul.u32 8, %s20
      %v359 = vld [vmem:[%s344] sm:$0xff]
      %v360 = vld [vmem:[%s344 + $0x8] sm:$0xff]
      %v361 = vld [vmem:[%s344 + $0x10] sm:$0xff]
      %v362 = vld [vmem:[%s344 + $0x18] sm:$0xff]
      %v363 = vld [vmem:[%s344 + $0x20] sm:$0xff]
      %v364 = vld [vmem:[%s344 + $0x28] sm:$0xff]
      %v365 = vld [vmem:[%s344 + $0x30] sm:$0xff]
      %v366 = vld [vmem:[%s344 + $0x38] sm:$0xff]
      %v367 = vpack.c.bf16 %v360, %v359
      %v368 = vpack.c.bf16 %v362, %v361
      %v369 = vpack.c.bf16 %v364, %v363
      %v370 = vpack.c.bf16 %v366, %v365
      %v371 = vld [vmem:[%s2] sm:$0xf]
      %v372 = vld [vmem:[%s2 + $0x4] sm:$0xf]
      %v373 = vld [vmem:[%s350] sm:$0xff]
      %v374 = vld [vmem:[%s350 + $0x8] sm:$0xff]
      %v375 = vld [vmem:[%s350 + $0x10] sm:$0xff]
      %v376 = vld [vmem:[%s350 + $0x18] sm:$0xff]
      %v377 = vld [vmem:[%s350 + $0x20] sm:$0xff]
      %v378 = vld [vmem:[%s350 + $0x28] sm:$0xff]
      %v379 = vld [vmem:[%s350 + $0x30] sm:$0xff]
      %v380 = vld [vmem:[%s350 + $0x38] sm:$0xff]
      %v381 = vpack.c.bf16 %v374, %v373
      %v382 = vpack.c.bf16 %v376, %v375
      %v383 = vpack.c.bf16 %v378, %v377
      %v384 = vpack.c.bf16 %v380, %v379
      %v385 = vld [vmem:[%s3] sm:$0xf]
      %vm386 = vcmask 64512
      %v388 = vsel %vm386, %v381, 0
      %v391 = vsel %vm386, %v382, 0
      %v394 = vsel %vm386, %v383, 0
      %v397 = vsel %vm386, %v384, 0
      %vm399 = vcmask 1043456
      %v401 = vsel %vm399, %v385, 0
      %403 = vmatpush.bf16.msra.mxu0 0
      %404 = vmatpush.bf16.msra.mxu0 0
      %405 = vmatpush.bf16.msra.mxu0 0
      %406 = vmatpush.bf16.msra.mxu0 0
      %407 = vmatpush.bf16.msra.mxu0 0
      %408 = vmatpush.bf16.msra.mxu0 0
      %409 = vmatpush.bf16.msra.mxu0 0
      %410 = vmatpush.bf16.msra.mxu0 %v401
      %411 = vmatmul.bf16.gmra.mxu0 %v388
      %v412 = vpop.f32.mrf.mxu0
      %v413 = vadd.f32 0.0, %v412
      %v414 = vpop.f32.mrf.mxu0
      %v415 = vadd.f32 0.0, %v414
      %416 = vmatmul.bf16.gmra.mxu0 %v391
      %v417 = vpop.f32.mrf.mxu0
      %v418 = vadd.f32 0.0, %v417
      %v419 = vpop.f32.mrf.mxu0
      %v420 = vadd.f32 0.0, %v419
      %421 = vmatmul.bf16.gmra.mxu0 %v394
      %v422 = vpop.f32.mrf.mxu0
      %v423 = vadd.f32 0.0, %v422
      %v424 = vpop.f32.mrf.mxu0
      %v425 = vadd.f32 0.0, %v424
      %426 = vmatmul.bf16.gmra.mxu0 %v397
      %v427 = vpop.f32.mrf.mxu0
      %v428 = vadd.f32 0.0, %v427
      %v429 = vpop.f32.mrf.mxu0
      %v430 = vadd.f32 0.0, %v429
      %431 = vdwg.mxu0
      %v434 = vunpack.c.l.b16 %v371
      %v435 = vunpack.c.l.b16 %v372
      %v436 = vpack.c.b16 %v435, %v434
      %vm438 = vcmask 130048
      %v440 = vsel %vm438, %v367, 0
      %v443 = vsel %vm438, %v368, 0
      %v446 = vsel %vm438, %v369, 0
      %v449 = vsel %vm438, %v370, 0
      %451 = vmatpush.bf16.msra.mxu0 0
      %452 = vmatpush.bf16.msra.mxu0 0
      %453 = vmatpush.bf16.msra.mxu0 0
      %454 = vmatpush.bf16.msra.mxu0 0
      %455 = vmatpush.bf16.msra.mxu0 0
      %456 = vmatpush.bf16.msra.mxu0 0
      %457 = vmatpush.bf16.msra.mxu0 0
      %458 = vmatpush.bf16.msra.mxu0 %v436
      %459 = vmatmul.bf16.gmra.mxu0 %v440
      %v460 = vpop.f32.mrf.mxu0
      %v461 = vadd.f32 %v413, %v460
      %v462 = vpop.f32.mrf.mxu0
      %v463 = vadd.f32 %v415, %v462
      %464 = vmatmul.bf16.gmra.mxu0 %v443
      %v465 = vpop.f32.mrf.mxu0
      %v466 = vadd.f32 %v418, %v465
      %v467 = vpop.f32.mrf.mxu0
      %v468 = vadd.f32 %v420, %v467
      %469 = vmatmul.bf16.gmra.mxu0 %v446
      %v470 = vpop.f32.mrf.mxu0
      %v471 = vadd.f32 %v423, %v470
      %v472 = vpop.f32.mrf.mxu0
      %v473 = vadd.f32 %v425, %v472
      %474 = vmatmul.bf16.gmra.mxu0 %v449
      %v475 = vpop.f32.mrf.mxu0
      %v476 = vadd.f32 %v428, %v475
      %v477 = vpop.f32.mrf.mxu0
      %v478 = vadd.f32 %v430, %v477
      %479 = vdwg.mxu0
      %v480 = vld [vmem:[%s4] sm:$0x1]
      %v482 = vperm.slane %v480, 0
      %v484 = vadd.f32 %v461, %v482
      %v485 = vadd.f32 %v463, %v482
      %v486 = vadd.f32 %v466, %v482
      %v487 = vadd.f32 %v468, %v482
      %v488 = vadd.f32 %v471, %v482
      %v489 = vadd.f32 %v473, %v482
      %v490 = vadd.f32 %v476, %v482
      %v491 = vadd.f32 %v478, %v482
      %v492 = vmax.f32 %v484, 0.0
      %v493 = vmax.f32 %v485, 0.0
      %v494 = vmax.f32 %v486, 0.0
      %v495 = vmax.f32 %v487, 0.0
      %v496 = vmax.f32 %v488, 0.0
      %v497 = vmax.f32 %v489, 0.0
      %v498 = vmax.f32 %v490, 0.0
      %v499 = vmax.f32 %v491, 0.0
      %v500 = vpack.c.bf16 %v493, %v492
      %v501 = vpack.c.bf16 %v495, %v494
      %v502 = vpack.c.bf16 %v497, %v496
      %v503 = vpack.c.bf16 %v499, %v498
      %v504 = vld [vmem:[%s5] sm:$0xf]
      %v505 = vld [vmem:[%s5 + $0x4] sm:$0xf]
      %v506 = vld [vmem:[%s5 + $0x8] sm:$0xf]
      %v507 = vld [vmem:[%s5 + $0xc] sm:$0xf]
      %v508 = vld [vmem:[%s6] sm:$0x1]
      %v510 = vperm.slane %v508, 0
      %v516 = vunpack.c.l.b16 %v504
      %v517 = vunpack.c.l.b16 %v505
      %v518 = vunpack.c.l.b16 %v506
      %v519 = vunpack.c.l.b16 %v507
      %v520 = vpack.c.b16 %v517, %v516
      %v521 = vpack.c.b16 %v519, %v518
      %vm524 = vcmask 261120
      %v526 = vsel %vm524, %v500, 0
      %v529 = vsel %vm524, %v501, 0
      %v532 = vsel %vm524, %v502, 0
      %v535 = vsel %vm524, %v503, 0
      %537 = vmatpush.bf16.msra.mxu0 0
      %538 = vmatpush.bf16.msra.mxu0 0
      %539 = vmatpush.bf16.msra.mxu0 0
      %540 = vmatpush.bf16.msra.mxu0 0
      %541 = vmatpush.bf16.msra.mxu0 0
      %542 = vmatpush.bf16.msra.mxu0 0
      %543 = vmatpush.bf16.msra.mxu0 %v521
      %544 = vmatpush.bf16.msra.mxu0 %v520
      %545 = vmatmul.bf16.gmra.mxu0 %v526
      %v546 = vpop.f32.mrf.mxu0
      %v547 = vadd.f32 %v510, %v546
      %v548 = vpop.f32.mrf.mxu0
      %v549 = vadd.f32 %v510, %v548
      %550 = vmatmul.bf16.gmra.mxu0 %v529
      %v551 = vpop.f32.mrf.mxu0
      %v552 = vadd.f32 %v510, %v551
      %v553 = vpop.f32.mrf.mxu0
      %v554 = vadd.f32 %v510, %v553
      %555 = vmatmul.bf16.gmra.mxu0 %v532
      %v556 = vpop.f32.mrf.mxu0
      %v557 = vadd.f32 %v510, %v556
      %v558 = vpop.f32.mrf.mxu0
      %v559 = vadd.f32 %v510, %v558
      %560 = vmatmul.bf16.gmra.mxu0 %v535
      %v561 = vpop.f32.mrf.mxu0
      %v562 = vadd.f32 %v510, %v561
      %v563 = vpop.f32.mrf.mxu0
      %v564 = vadd.f32 %v510, %v563
      %565 = vdwg.mxu0
      %v566 = vmax.f32 %v547, 0.0
      %v567 = vmax.f32 %v549, 0.0
      %v568 = vmax.f32 %v552, 0.0
      %v569 = vmax.f32 %v554, 0.0
      %v570 = vmax.f32 %v557, 0.0
      %v571 = vmax.f32 %v559, 0.0
      %v572 = vmax.f32 %v562, 0.0
      %v573 = vmax.f32 %v564, 0.0
      %v574 = vpack.c.bf16 %v567, %v566
      %v575 = vpack.c.bf16 %v569, %v568
      %v576 = vpack.c.bf16 %v571, %v570
      %v577 = vpack.c.bf16 %v573, %v572
      %v578 = vld [vmem:[%s7] sm:$0xf]
      %v579 = vld [vmem:[%s7 + $0x4] sm:$0xf]
      %v580 = vld [vmem:[%s7 + $0x8] sm:$0xf]
      %v581 = vld [vmem:[%s7 + $0xc] sm:$0xf]
      %v582 = vld [vmem:[%s8] sm:$0x1]
      %v584 = vperm.slane %v582, 0
      %v590 = vunpack.c.l.b16 %v578
      %v591 = vunpack.c.l.b16 %v579
      %v592 = vunpack.c.l.b16 %v580
      %v593 = vunpack.c.l.b16 %v581
      %v594 = vpack.c.b16 %v591, %v590
      %v595 = vpack.c.b16 %v593, %v592
      %v599 = vsel %vm524, %v574, 0
      %v602 = vsel %vm524, %v575, 0
      %v605 = vsel %vm524, %v576, 0
      %v608 = vsel %vm524, %v577, 0
      %610 = vmatpush.bf16.msra.mxu0 0
      %611 = vmatpush.bf16.msra.mxu0 0
      %612 = vmatpush.bf16.msra.mxu0 0
      %613 = vmatpush.bf16.msra.mxu0 0
      %614 = vmatpush.bf16.msra.mxu0 0
      %615 = vmatpush.bf16.msra.mxu0 0
      %616 = vmatpush.bf16.msra.mxu0 %v595
      %617 = vmatpush.bf16.msra.mxu0 %v594
      %618 = vmatmul.bf16.gmra.mxu0 %v599
      %v619 = vpop.f32.mrf.mxu0
      %v620 = vadd.f32 %v584, %v619
      %v621 = vpop.f32.mrf.mxu0
      %v622 = vadd.f32 %v584, %v621
      %623 = vmatmul.bf16.gmra.mxu0 %v602
      %v624 = vpop.f32.mrf.mxu0
      %v625 = vadd.f32 %v584, %v624
      %v626 = vpop.f32.mrf.mxu0
      %v627 = vadd.f32 %v584, %v626
      %628 = vmatmul.bf16.gmra.mxu0 %v605
      %v629 = vpop.f32.mrf.mxu0
      %v630 = vadd.f32 %v584, %v629
      %v631 = vpop.f32.mrf.mxu0
      %v632 = vadd.f32 %v584, %v631
      %633 = vmatmul.bf16.gmra.mxu0 %v608
      %v634 = vpop.f32.mrf.mxu0
      %v635 = vadd.f32 %v584, %v634
      %v636 = vpop.f32.mrf.mxu0
      %v637 = vadd.f32 %v584, %v636
      %638 = vdwg.mxu0
      %639 = vst.msk [vmem:[%s356] sm:$0xff] %vm438, %v620
      %640 = vst.msk [vmem:[%s356 + $0x8] sm:$0xff] %vm438, %v622
      %641 = vst.msk [vmem:[%s356 + $0x10] sm:$0xff] %vm438, %v625
      %642 = vst.msk [vmem:[%s356 + $0x18] sm:$0xff] %vm438, %v627
      %643 = vst.msk [vmem:[%s356 + $0x20] sm:$0xff] %vm438, %v630
      %644 = vst.msk [vmem:[%s356 + $0x28] sm:$0xff] %vm438, %v632
      %645 = vst.msk [vmem:[%s356 + $0x30] sm:$0xff] %vm438, %v635
      %646 = vst.msk [vmem:[%s356 + $0x38] sm:$0xff] %vm438, %v637
      %s647 = smul.u32 8, %s20
      %p648 = scmp.lt.s32.totalorder %s647, 15
      %s649 = scalar_select %p648, %s647, 15
      %s650 = smul.addr %s649, 8
      %s651 = scalar_lea.vmem %s9, %s650
      // Predicated region
      $region57: #{dynamics_model_forward.1} parent=55 // pred_check
        %p652 = pneg %p237
      $region58: #{dynamics_model_forward.1} parent=55 // pred_check_branch
        %654 = sbr.rel (%p652) target = $region60
      $region59: #{dynamics_model_forward.1} parent=55 // pred_region
        %s655 = smul.u32 8, %s20
      $region60: #{dynamics_model_forward.1} parent=55 // pred_fallthru
        _
    $region56: #{dynamics_model_forward.1} parent=5 // pred_fallthru
      _
    %p656 = scmp.le.s32.totalorder 2, %s15
    // Predicated region
    $region61: #{dynamics_model_forward.1} parent=5 // pred_check
      %p657 = pneg %p656
    $region62: #{dynamics_model_forward.1} parent=5 // pred_check_branch
      %659 = sbr.rel (%p657) target = $region64
    $region63: #{dynamics_model_forward.1} parent=5 // pred_region
      %s660 = ssub.s32 %s15, 2
      // Predicated region
      $region65: #{dynamics_model_forward.1} parent=63 // pred_check
        %p661 = pneg %p243
      $region66: #{dynamics_model_forward.1} parent=63 // pred_check_branch
        %663 = sbr.rel (%p661) target = $region68
      $region67: #{dynamics_model_forward.1} parent=63 // pred_region
        %s664 = smul.u32 8, %s21
        %p665 = scmp.lt.s32.totalorder %s664, 15
        %s666 = scalar_select %p665, %s664, 15
        %s667 = smul.addr %s666, 8
        %s668 = scalar_lea.vmem %s9, %s667
      $region68: #{dynamics_model_forward.1} parent=63 // pred_fallthru
        _
    $region64: #{dynamics_model_forward.1} parent=5 // pred_fallthru
      _
  $region6: #{dynamics_model_forward.1} parent=0 // loop_footer
    %s19 = sadd.s32 1, %s15
  $region7: #{dynamics_model_forward.1} parent=0 // loop_footer_branch
    %14 = sbr.rel target = $region3
  $region8: #{dynamics_model_forward.1} parent=0 // loop_exit
    _

</llo_original>
